<compile_context>
chip_gen: v6e
topology: v6e:2x2x1
jax: 0.10.0
libtpu: 0.0.40
codegen_flags: <defaults>
</compile_context>

<pallas_src>
import functools
import math

import jax
import jax.numpy as jnp
from jax.experimental import pallas as pl
from jax.experimental.pallas import tpu as pltpu

EPS = 1e-5          # nn.LayerNorm default eps
LANE = 128
SUBLANE = 8


def _round_up(n, m):
    return (n + m - 1) // m * m


def _mamba_kernel(x_ref, w_in_ref, b_in_ref, w_bc_ref, b_bc_ref,
                  w_out_ref, b_out_ref, gamma_ref, beta_ref, o_ref):
    wt = w_in_ref.dtype  # matmul weight dtype (bf16 default); accumulate in f32

    x = x_ref[...]                                                  # (TN, d_in) f32

    # x = in_proj(x)  -- cast activation to the weight dtype at the dot boundary only
    h = jnp.dot(x.astype(wt), w_in_ref[...],
                preferred_element_type=jnp.float32) + b_in_ref[...]

    # B + C fused:  s_B(x) + s_C(x) = x @ (w_B + w_C) + (b_B + b_C)
    bc = jnp.dot(h.astype(wt), w_bc_ref[...],
                 preferred_element_type=jnp.float32) + b_bc_ref[...]

    # x = relu(x + B + C)   (f32 elementwise)
    h = jnp.maximum(h + bc, 0.0)

    # x = out_proj(x)
    y = jnp.dot(h.astype(wt), w_out_ref[...],
                preferred_element_type=jnp.float32) + b_out_ref[...]

    # TODO(synk): nn.Dropout(p=0.1) is identity here (module in eval mode).

    # Residual + LayerNorm over the true d_input lanes (last dim is unpadded,
    # so no lane mask is needed).
    r = y + x
    mean = jnp.mean(r, axis=-1, keepdims=True)
    centered = r - mean
    var = jnp.mean(centered * centered, axis=-1, keepdims=True)
    normed = centered * jax.lax.rsqrt(var + EPS)
    o_ref[...] = (normed * gamma_ref[...] + beta_ref[...]).astype(o_ref.dtype)


def prepare_params(params, d_input, d_model, *, weight_dtype=jnp.bfloat16):
    """One-time weight prep: fuse w_B + w_C and pad the d_model axes to a
    multiple of 128 lanes (padded lanes are exactly zero, so h/bc/y stay
    correct).  Only the matmul weights are cast to `weight_dtype` (bf16
    default: bf16-native MXU + half the resident VMEM); biases, gamma, beta
    stay f32.  d_input axes are left unpadded so the activation path needs no
    HBM pad/slice round-trips."""
    dp_model = _round_up(d_model, LANE)

    def pad_cols(a, cols):
        return jnp.pad(a, ((0, 0), (0, cols - a.shape[1])))

    def pad_rows_cols(a, rows, cols):
        return jnp.pad(a, ((0, rows - a.shape[0]), (0, cols - a.shape[1])))

    return {
        "w_in": pad_cols(params["w_in"], dp_model).astype(weight_dtype),
        "b_in": pad_cols(params["b_in"], dp_model),
        "w_bc": pad_rows_cols(params["w_B"] + params["w_C"],
                              dp_model, dp_model).astype(weight_dtype),
        "b_bc": pad_cols(params["b_B"] + params["b_C"], dp_model),
        "w_out": jnp.pad(params["w_out"],
                         ((0, dp_model - d_model), (0, 0))).astype(weight_dtype),
        "b_out": params["b_out"],
        "gamma": params["gamma"],
        "beta": params["beta"],
    }


def mamba_block(x, prep, *, d_input, d_model, block_rows=1024):
    """x: (..., d_input) float32.  Returns same shape/dtype."""
    orig_shape = x.shape
    assert orig_shape[-1] == d_input
    n = int(math.prod(orig_shape[:-1]))
    x2d = x.reshape(n, d_input)

    dp_model = prep["w_in"].shape[1]

    weight_args = (prep["w_in"], prep["b_in"], prep["w_bc"], prep["b_bc"],
                   prep["w_out"], prep["b_out"], prep["gamma"], prep["beta"])
    wbytes = sum(int(math.prod(a.shape)) * a.dtype.itemsize for a in weight_args)

    # Per-generation VMEM budget with headroom for compiler-internal scratch
    # (v7x: ~56 MiB of 64; v5e/v6e: ~120 MiB of 128 -- no artificial 64 cap).
    try:
        vmem_cap = int(getattr(pltpu.get_tpu_info(), "vmem_capacity_bytes", 64 << 20))
    except Exception:  # conservative fallback if the query is unavailable
        vmem_cap = 64 << 20
    vmem_budget = max(vmem_cap - (8 << 20), 16 << 20)

    # TODO(synk): for d_model large enough that w_bc/w_out exceed this budget
    # (~5.8k bf16 on v7x), stream weight K/N tiles via a second "arbitrary"
    # grid axis instead of keeping them whole-array resident.
    def est_vmem(rows):
        return (wbytes                                  # weights, single-buffered
                + 2 * 2 * rows * d_input * 4            # x / out tiles, double-buffered
                + 8 * rows * dp_model * 4)              # f32 temporaries + bf16 casts

    # Row tile: as large as the budget allows (amortizes ~0.35 us/grid-step,
    # feeds the MXU a bigger M), multiple of 8.
    tn = min(_round_up(n, SUBLANE), _round_up(block_rows, SUBLANE))
    while tn > SUBLANE and est_vmem(tn) > vmem_budget:
        tn = _round_up(tn // 2, SUBLANE)
    vmem_limit = int(min(vmem_budget, est_vmem(tn) + (8 << 20)))

    grid = (pl.cdiv(n, tn),)

    # Last dim = true d_input (full-array last dim is exempt from the 128
    # rule): no wrapper-side pad of x / slice of out.
    row_spec = pl.BlockSpec((tn, d_input), lambda i: (i, 0))
    # Whole-array VMEM residency for weights/biases: one copy for the whole
    # grid, no per-input pipeline double buffer.
    vmem_spec = pl.BlockSpec(memory_space=pltpu.MemorySpace.VMEM)

    # True-dim FLOPs / bf16 weight bytes: for small d_input this is clearly
    # memory-bound and XLA should schedule it accordingly.
    cost = pl.CostEstimate(
        flops=int(2 * n * (d_input * d_model + d_model * d_model + d_model * d_input)),
        transcendentals=int(n),                                  # one rsqrt per row
        bytes_accessed=int(2 * n * d_input * 4 + wbytes),
    )

    out = pl.pallas_call(
        _mamba_kernel,
        out_shape=jax.ShapeDtypeStruct((n, d_input), jnp.float32),
        grid=grid,
        in_specs=[row_spec] + [vmem_spec] * len(weight_args),
        out_specs=row_spec,
        compiler_params=pltpu.CompilerParams(
            # TODO(synk): if profiling shows a single active TensorCore on
            # v7x, switch this axis to pltpu.CORE_PARALLEL.
            dimension_semantics=("parallel",),
            vmem_limit_bytes=vmem_limit,
        ),
        cost_estimate=cost,
    )(x2d, *weight_args)

    return out.reshape(orig_shape)


def init_params(key, d_input, d_model):
    """PyTorch-default-style init (uniform(-1/sqrt(fan_in), 1/sqrt(fan_in))),
    LayerNorm gamma=1, beta=0.  Weights stored (in_features, out_features)."""
    def linear(k, fan_in, fan_out):
        kw, kb = jax.random.split(k)
        bound = 1.0 / math.sqrt(fan_in)
        w = jax.random.uniform(kw, (fan_in, fan_out), jnp.float32, -bound, bound)
        b = jax.random.uniform(kb, (1, fan_out), jnp.float32, -bound, bound)
        return w, b

    k_in, k_B, k_C, k_out = jax.random.split(key, 4)
    w_in, b_in = linear(k_in, d_input, d_model)
    w_B, b_B = linear(k_B, d_model, d_model)
    w_C, b_C = linear(k_C, d_model, d_model)
    w_out, b_out = linear(k_out, d_model, d_input)
    return {
        "w_in": w_in, "b_in": b_in,
        "w_B": w_B, "b_B": b_B,
        "w_C": w_C, "b_C": b_C,
        "w_out": w_out, "b_out": b_out,
        "gamma": jnp.ones((1, d_input), jnp.float32),
        "beta": jnp.zeros((1, d_input), jnp.float32),
    }


def reference_forward(x2d, p):
    """Pure-JAX faithful translation of CustomMambaBlock.forward (eval mode, f32)."""
    h = x2d @ p["w_in"] + p["b_in"]
    Bm = h @ p["w_B"] + p["b_B"]
    Cm = h @ p["w_C"] + p["b_C"]
    h = jnp.maximum(h + Bm + Cm, 0.0)
    y = h @ p["w_out"] + p["b_out"]
    r = y + x2d
    mean = jnp.mean(r, axis=-1, keepdims=True)
    var = jnp.mean((r - mean) ** 2, axis=-1, keepdims=True)
    return (r - mean) / jnp.sqrt(var + EPS) * p["gamma"] + p["beta"]


if __name__ == "__main__":
    batch, seq, d_input, d_model = 2, 8, 16, 32

    key = jax.random.PRNGKey(0)
    k_x, k_p = jax.random.split(key)
    x = jax.random.normal(k_x, (batch, seq, d_input), jnp.float32)
    params = init_params(k_p, d_input, d_model)

    # bf16-native MXU path by default (set jnp.float32 for bit-closer output).
    weight_dtype = jnp.bfloat16
    prep = prepare_params(params, d_input, d_model, weight_dtype=weight_dtype)

    fwd = jax.jit(functools.partial(mamba_block, d_input=d_input, d_model=d_model))
    out = fwd(x, prep)
    jax.block_until_ready(out)

    ref = reference_forward(x.reshape(-1, d_input), params).reshape(batch, seq, d_input)
    # Tolerance gated on the weight dtype: the bf16 path rounds matmul operands
    # at the dot boundary; the f32 path differs from the PyTorch module only by
    # the w_B+w_C fusion's float summation order.
    tol = 1e-4 if weight_dtype == jnp.float32 else 5e-2
    assert out.shape == x.shape
    assert bool(jnp.allclose(out, ref, atol=tol, rtol=tol)), "mismatch vs reference"

    print("KERNEL_OK")
</pallas_src>

<mosaic_0001>
module attributes {stable_mosaic.version = 11 : i64} {
  func.func @_mamba_kernel(%arg0: i32, %arg1: memref<16x16xf32, #tpu.memory_space<vmem>>, %arg2: memref<16x128xbf16, #tpu.memory_space<vmem>>, %arg3: memref<1x128xf32, #tpu.memory_space<vmem>>, %arg4: memref<128x128xbf16, #tpu.memory_space<vmem>>, %arg5: memref<1x128xf32, #tpu.memory_space<vmem>>, %arg6: memref<128x16xbf16, #tpu.memory_space<vmem>>, %arg7: memref<1x16xf32, #tpu.memory_space<vmem>>, %arg8: memref<1x16xf32, #tpu.memory_space<vmem>>, %arg9: memref<1x16xf32, #tpu.memory_space<vmem>>, %arg10: memref<16x16xf32, #tpu.memory_space<vmem>>) attributes {dimension_semantics = [#tpu.dimension_semantics<parallel>], iteration_bounds = array<i64: 1>, scalar_prefetch = 0 : i64, scratch_operands = 0 : i64, tpu.core_type = #tpu.core_type<tc>, window_params = [{transform_indices = @transform_0, window_bounds = array<i64: 16, 16>}, {pipeline_mode = #tpu.pipeline_mode<synchronous>, transform_indices = @transform_1, window_bounds = array<i64: 16, 128>}, {pipeline_mode = #tpu.pipeline_mode<synchronous>, transform_indices = @transform_2, window_bounds = array<i64: 1, 128>}, {pipeline_mode = #tpu.pipeline_mode<synchronous>, transform_indices = @transform_3, window_bounds = array<i64: 128, 128>}, {pipeline_mode = #tpu.pipeline_mode<synchronous>, transform_indices = @transform_4, window_bounds = array<i64: 1, 128>}, {pipeline_mode = #tpu.pipeline_mode<synchronous>, transform_indices = @transform_5, window_bounds = array<i64: 128, 16>}, {pipeline_mode = #tpu.pipeline_mode<synchronous>, transform_indices = @transform_6, window_bounds = array<i64: 1, 16>}, {pipeline_mode = #tpu.pipeline_mode<synchronous>, transform_indices = @transform_7, window_bounds = array<i64: 1, 16>}, {pipeline_mode = #tpu.pipeline_mode<synchronous>, transform_indices = @transform_8, window_bounds = array<i64: 1, 16>}, {transform_indices = @transform_9, window_bounds = array<i64: 16, 16>}]} {
    %c0 = arith.constant 0 : index
    %c0_0 = arith.constant 0 : index
    %0 = vector.load %arg1[%c0, %c0_0] : memref<16x16xf32, #tpu.memory_space<vmem>>, vector<16x16xf32>
    %1 = arith.truncf %0 : vector<16x16xf32> to vector<16x16xbf16>
    %c0_1 = arith.constant 0 : index
    %c0_2 = arith.constant 0 : index
    %2 = vector.load %arg2[%c0_1, %c0_2] : memref<16x128xbf16, #tpu.memory_space<vmem>>, vector<16x128xbf16>
    %cst = arith.constant dense<0.000000e+00> : vector<16x128xf32>
    %3 = tpu.matmul %1, %2, %cst {dimension_numbers = #tpu.dot_dimension_numbers<[1], [0], [0], [1], [0, 0, 1, 1], [], []>} : vector<16x16xbf16>, vector<16x128xbf16>, vector<16x128xf32> -> vector<16x128xf32>
    %c0_3 = arith.constant 0 : index
    %c0_4 = arith.constant 0 : index
    %4 = vector.load %arg3[%c0_3, %c0_4] : memref<1x128xf32, #tpu.memory_space<vmem>>, vector<1x128xf32>
    %5 = vector.broadcast %4 : vector<1x128xf32> to vector<16x128xf32>
    %6 = arith.addf %3, %5 : vector<16x128xf32>
    %7 = arith.truncf %6 : vector<16x128xf32> to vector<16x128xbf16>
    %c0_5 = arith.constant 0 : index
    %c0_6 = arith.constant 0 : index
    %8 = vector.load %arg4[%c0_5, %c0_6] : memref<128x128xbf16, #tpu.memory_space<vmem>>, vector<128x128xbf16>
    %cst_7 = arith.constant dense<0.000000e+00> : vector<16x128xf32>
    %9 = tpu.matmul %7, %8, %cst_7 {dimension_numbers = #tpu.dot_dimension_numbers<[1], [0], [0], [1], [0, 0, 1, 1], [], []>} : vector<16x128xbf16>, vector<128x128xbf16>, vector<16x128xf32> -> vector<16x128xf32>
    %c0_8 = arith.constant 0 : index
    %c0_9 = arith.constant 0 : index
    %10 = vector.load %arg5[%c0_8, %c0_9] : memref<1x128xf32, #tpu.memory_space<vmem>>, vector<1x128xf32>
    %11 = vector.broadcast %10 : vector<1x128xf32> to vector<16x128xf32>
    %12 = arith.addf %9, %11 : vector<16x128xf32>
    %13 = arith.addf %6, %12 : vector<16x128xf32>
    %cst_10 = arith.constant 0.000000e+00 : f32
    %14 = vector.broadcast %cst_10 : f32 to vector<16x128xf32>
    %15 = arith.maximumf %13, %14 : vector<16x128xf32>
    %16 = arith.truncf %15 : vector<16x128xf32> to vector<16x128xbf16>
    %c0_11 = arith.constant 0 : index
    %c0_12 = arith.constant 0 : index
    %17 = vector.load %arg6[%c0_11, %c0_12] : memref<128x16xbf16, #tpu.memory_space<vmem>>, vector<128x16xbf16>
    %cst_13 = arith.constant dense<0.000000e+00> : vector<16x16xf32>
    %18 = tpu.matmul %16, %17, %cst_13 {dimension_numbers = #tpu.dot_dimension_numbers<[1], [0], [0], [1], [0, 0, 1, 1], [], []>} : vector<16x128xbf16>, vector<128x16xbf16>, vector<16x16xf32> -> vector<16x16xf32>
    %c0_14 = arith.constant 0 : index
    %c0_15 = arith.constant 0 : index
    %19 = vector.load %arg7[%c0_14, %c0_15] : memref<1x16xf32, #tpu.memory_space<vmem>>, vector<1x16xf32>
    %20 = vector.broadcast %19 : vector<1x16xf32> to vector<16x16xf32>
    %21 = arith.addf %18, %20 : vector<16x16xf32>
    %22 = arith.addf %21, %0 : vector<16x16xf32>
    %cst_16 = arith.constant dense<0.000000e+00> : vector<16xf32>
    %23 = vector.multi_reduction <add>, %22, %cst_16 [1] : vector<16x16xf32> to vector<16xf32>
    %24 = vector.shape_cast %23 : vector<16xf32> to vector<16x1xf32>
    %cst_17 = arith.constant 1.600000e+01 : f32
    %25 = vector.broadcast %cst_17 : f32 to vector<16x1xf32>
    %26 = arith.divf %24, %25 : vector<16x1xf32>
    %27 = vector.broadcast %26 : vector<16x1xf32> to vector<16x16xf32>
    %28 = arith.subf %22, %27 : vector<16x16xf32>
    %29 = arith.mulf %28, %28 : vector<16x16xf32>
    %cst_18 = arith.constant dense<0.000000e+00> : vector<16xf32>
    %30 = vector.multi_reduction <add>, %29, %cst_18 [1] : vector<16x16xf32> to vector<16xf32>
    %31 = vector.shape_cast %30 : vector<16xf32> to vector<16x1xf32>
    %cst_19 = arith.constant 1.600000e+01 : f32
    %32 = vector.broadcast %cst_19 : f32 to vector<16x1xf32>
    %33 = arith.divf %31, %32 : vector<16x1xf32>
    %cst_20 = arith.constant 9.99999974E-6 : f32
    %34 = vector.broadcast %cst_20 : f32 to vector<16x1xf32>
    %35 = arith.addf %33, %34 : vector<16x1xf32>
    %36 = math.rsqrt %35 : vector<16x1xf32>
    %37 = vector.broadcast %36 : vector<16x1xf32> to vector<16x16xf32>
    %38 = arith.mulf %28, %37 : vector<16x16xf32>
    %c0_21 = arith.constant 0 : index
    %c0_22 = arith.constant 0 : index
    %39 = vector.load %arg8[%c0_21, %c0_22] : memref<1x16xf32, #tpu.memory_space<vmem>>, vector<1x16xf32>
    %40 = vector.broadcast %39 : vector<1x16xf32> to vector<16x16xf32>
    %41 = arith.mulf %38, %40 : vector<16x16xf32>
    %c0_23 = arith.constant 0 : index
    %c0_24 = arith.constant 0 : index
    %42 = vector.load %arg9[%c0_23, %c0_24] : memref<1x16xf32, #tpu.memory_space<vmem>>, vector<1x16xf32>
    %43 = vector.broadcast %42 : vector<1x16xf32> to vector<16x16xf32>
    %44 = arith.addf %41, %43 : vector<16x16xf32>
    %c0_25 = arith.constant 0 : index
    %c0_26 = arith.constant 0 : index
    %45 = vector.load %arg10[%c0_25, %c0_26] : memref<16x16xf32, #tpu.memory_space<vmem>>, vector<16x16xf32>
    tpu.vector_store %arg10[%c0_25, %c0_26], %44 {strides = array<i32>} : memref<16x16xf32, #tpu.memory_space<vmem>>, vector<16x16xf32>,
    return
  }
  func.func @transform_0(%arg0: i32) -> (i32, i32) {
    %c0_i32 = arith.constant 0 : i32
    %c0_i32_0 = arith.constant 0 : i32
    return %arg0, %c0_i32 : i32, i32
  }
  func.func @transform_1(%arg0: i32) -> (i32, i32) {
    %c0_i32 = arith.constant 0 : i32
    %c0_i32_0 = arith.constant 0 : i32
    %c0_i32_1 = arith.constant 0 : i32
    return %c0_i32, %c0_i32_0 : i32, i32
  }
  func.func @transform_2(%arg0: i32) -> (i32, i32) {
    %c0_i32 = arith.constant 0 : i32
    %c0_i32_0 = arith.constant 0 : i32
    %c0_i32_1 = arith.constant 0 : i32
    return %c0_i32, %c0_i32_0 : i32, i32
  }
  func.func @transform_3(%arg0: i32) -> (i32, i32) {
    %c0_i32 = arith.constant 0 : i32
    %c0_i32_0 = arith.constant 0 : i32
    %c0_i32_1 = arith.constant 0 : i32
    return %c0_i32, %c0_i32_0 : i32, i32
  }
  func.func @transform_4(%arg0: i32) -> (i32, i32) {
    %c0_i32 = arith.constant 0 : i32
    %c0_i32_0 = arith.constant 0 : i32
    %c0_i32_1 = arith.constant 0 : i32
    return %c0_i32, %c0_i32_0 : i32, i32
  }
  func.func @transform_5(%arg0: i32) -> (i32, i32) {
    %c0_i32 = arith.constant 0 : i32
    %c0_i32_0 = arith.constant 0 : i32
    %c0_i32_1 = arith.constant 0 : i32
    return %c0_i32, %c0_i32_0 : i32, i32
  }
  func.func @transform_6(%arg0: i32) -> (i32, i32) {
    %c0_i32 = arith.constant 0 : i32
    %c0_i32_0 = arith.constant 0 : i32
    %c0_i32_1 = arith.constant 0 : i32
    return %c0_i32, %c0_i32_0 : i32, i32
  }
  func.func @transform_7(%arg0: i32) -> (i32, i32) {
    %c0_i32 = arith.constant 0 : i32
    %c0_i32_0 = arith.constant 0 : i32
    %c0_i32_1 = arith.constant 0 : i32
    return %c0_i32, %c0_i32_0 : i32, i32
  }
  func.func @transform_8(%arg0: i32) -> (i32, i32) {
    %c0_i32 = arith.constant 0 : i32
    %c0_i32_0 = arith.constant 0 : i32
    %c0_i32_1 = arith.constant 0 : i32
    return %c0_i32, %c0_i32_0 : i32, i32
  }
  func.func @transform_9(%arg0: i32) -> (i32, i32) {
    %c0_i32 = arith.constant 0 : i32
    %c0_i32_0 = arith.constant 0 : i32
    return %arg0, %c0_i32 : i32, i32
  }
}

</mosaic_0001>

<llo_original>
// kernel: mamba_block.1
$region0: #{mamba_block.1}
  #allocation0 [shape = 'u32[]', space=smem, size = 0x4, offset = 0x4, fixed_abs, tag = 'smem constant byte address 0x4 - core index']
  #allocation1 [shape = 'u32[144,128]{1,0:T(1,128)}', space=vmem, size = 0x12000, scoped, tag = 'internal scratch']
  %s0 = inlined_call_operand.vmem [shape: f32[16,16], index: 0, kind: input, shape index: {}]
  %s1 = inlined_call_operand.hbm [shape: bf16[16,128], index: 1, kind: input, shape index: {}]
  %s2 = inlined_call_operand.hbm [shape: f32[1,128], index: 2, kind: input, shape index: {}]
  %s3 = inlined_call_operand.vmem [shape: bf16[128,128], index: 3, kind: input, shape index: {}]
  %s4 = inlined_call_operand.hbm [shape: f32[1,128], index: 4, kind: input, shape index: {}]
  %s5 = inlined_call_operand.vmem [shape: bf16[128,16], index: 5, kind: input, shape index: {}]
  %s6 = inlined_call_operand.hbm [shape: f32[1,16], index: 6, kind: input, shape index: {}]
  %s7 = inlined_call_operand.hbm [shape: f32[1,16], index: 7, kind: input, shape index: {}]
  %s8 = inlined_call_operand.hbm [shape: f32[1,16], index: 8, kind: input, shape index: {}]
  %s9 = inlined_call_operand.hbm [shape: f32[16,16], index: 9, kind: output, shape index: {}]
  %s10 = sld [smem:[#allocation0]]
  $region70: #{mamba_block.1} parent=0
    _
  %s12 = ssub.s32 1, %s10
  %s13 = scalar_select 0, %s12, %s10
  $region1: #{mamba_block.1} parent=0
    #allocation2 [shape = 'u8[4096]{0}', space=vmem, size = 0x1000, scoped, tag = 'input window, operand 1, single buffered']
    #allocation3 [shape = 's32[1]{0}', space=sflag, size = 0x4, scoped, tag = 'scoped memory for mamba_block.1']
    #allocation4 [shape = 's32[1]{0}', space=sflag, size = 0x4, scoped, tag = 'scoped memory for mamba_block.1']
    #allocation5 [shape = 'u8[512]{0}', space=vmem, size = 0x400, scoped, tag = 'input window, operand 2, single buffered']
    #allocation6 [shape = 's32[1]{0}', space=sflag, size = 0x4, scoped, tag = 'scoped memory for mamba_block.1']
    #allocation7 [shape = 'u8[512]{0}', space=vmem, size = 0x400, scoped, tag = 'input window, operand 4, single buffered']
    #allocation8 [shape = 'u8[512]{0}', space=vmem, size = 0x400, scoped, tag = 'input window, operand 6, single buffered']
    #allocation9 [shape = 's32[1]{0}', space=sflag, size = 0x4, scoped, tag = 'scoped memory for mamba_block.1']
    #allocation10 [shape = 'u8[512]{0}', space=vmem, size = 0x400, scoped, tag = 'input window, operand 7, single buffered']
    #allocation11 [shape = 'u8[512]{0}', space=vmem, size = 0x400, scoped, tag = 'input window, operand 8, single buffered']
    #allocation12 [shape = 's32[1]{0}', space=sflag, size = 0x4, scoped, tag = 'scoped memory for mamba_block.1']
    #allocation13 [shape = 'u8[8192]{0}', space=vmem, size = 0x2000, scoped, tag = 'output window, operand 0, single buffered']
    %14 = vsyncpa [#allocation3], 0
    %15 = vsyncpa [#allocation6], 0
    %16 = vsyncpa [#allocation9], 0
    %17 = vsyncpa [#allocation12], 0
    %18 = vsyncpa [#allocation4], 0
    // Predicated region
    $region2: #{mamba_block.1} parent=1 // pred_check
      _
    $region3: #{mamba_block.1} parent=1 // pred_check_branch
      %20 = sbr.rel (0) target = $region5
    $region4: #{mamba_block.1} parent=1 // pred_region
      _
    $region5: #{mamba_block.1} parent=1 // pred_fallthru
      _
    // Predicated region
    $region6: #{mamba_block.1} parent=1 // pred_check
      _
    $region7: #{mamba_block.1} parent=1 // pred_check_branch
      %22 = sbr.rel (0) target = $region9
    $region8: #{mamba_block.1} parent=1 // pred_region
      %s24 = ssub.s32 128, 128
      %25 = vsyncadd [#allocation3], %s24
      %s26 = sshll.u32 [#allocation2], 4
      %s27 = int_to_ptr.vmem [resolvable:$true] %s26
      %32 = dma.hbm_to_vmem [thread:$0]  %s1, 128, %s27, [#allocation3], 64, 64, 4
    $region9: #{mamba_block.1} parent=1 // pred_fallthru
      _
    // Predicated region
    $region10: #{mamba_block.1} parent=1 // pred_check
      _
    $region11: #{mamba_block.1} parent=1 // pred_check_branch
      %34 = sbr.rel (0) target = $region13
    $region12: #{mamba_block.1} parent=1 // pred_region
      %s36 = ssub.s32 16, 16
      %37 = vsyncadd [#allocation6], %s36
      %s39 = sshll.u32 [#allocation5], 4
      %s40 = int_to_ptr.vmem [resolvable:$true] %s39
      %42 = dma.hbm_to_vmem [thread:$0]  %s2, 16, %s40, [#allocation6]
    $region13: #{mamba_block.1} parent=1 // pred_fallthru
      _
    // Predicated region
    $region14: #{mamba_block.1} parent=1 // pred_check
      _
    $region15: #{mamba_block.1} parent=1 // pred_check_branch
      %44 = sbr.rel (0) target = $region17
    $region16: #{mamba_block.1} parent=1 // pred_region
      _
    $region17: #{mamba_block.1} parent=1 // pred_fallthru
      _
    // Predicated region
    $region18: #{mamba_block.1} parent=1 // pred_check
      _
    $region19: #{mamba_block.1} parent=1 // pred_check_branch
      %46 = sbr.rel (0) target = $region21
    $region20: #{mamba_block.1} parent=1 // pred_region
      %s48 = ssub.s32 16, 16
      %49 = vsyncadd [#allocation6], %s48
      %s51 = sshll.u32 [#allocation7], 4
      %s52 = int_to_ptr.vmem [resolvable:$true] %s51
      %54 = dma.hbm_to_vmem [thread:$0]  %s4, 16, %s52, [#allocation6]
    $region21: #{mamba_block.1} parent=1 // pred_fallthru
      _
    // Predicated region
    $region22: #{mamba_block.1} parent=1 // pred_check
      _
    $region23: #{mamba_block.1} parent=1 // pred_check_branch
      %56 = sbr.rel (0) target = $region25
    $region24: #{mamba_block.1} parent=1 // pred_region
      _
    $region25: #{mamba_block.1} parent=1 // pred_fallthru
      _
    // Predicated region
    $region26: #{mamba_block.1} parent=1 // pred_check
      _
    $region27: #{mamba_block.1} parent=1 // pred_check_branch
      %58 = sbr.rel (0) target = $region29
    $region28: #{mamba_block.1} parent=1 // pred_region
      %s60 = ssub.s32 16, 16
      %61 = vsyncadd [#allocation9], %s60
      %s63 = sshll.u32 [#allocation8], 4
      %s64 = int_to_ptr.vmem [resolvable:$true] %s63
      %66 = dma.hbm_to_vmem [thread:$0]  %s6, 16, %s64, [#allocation9]
    $region29: #{mamba_block.1} parent=1 // pred_fallthru
      _
    // Predicated region
    $region30: #{mamba_block.1} parent=1 // pred_check
      _
    $region31: #{mamba_block.1} parent=1 // pred_check_branch
      %68 = sbr.rel (0) target = $region33
    $region32: #{mamba_block.1} parent=1 // pred_region
      %s70 = ssub.s32 16, 16
      %71 = vsyncadd [#allocation9], %s70
      %s73 = sshll.u32 [#allocation10], 4
      %s74 = int_to_ptr.vmem [resolvable:$true] %s73
      %76 = dma.hbm_to_vmem [thread:$0]  %s7, 16, %s74, [#allocation9]
    $region33: #{mamba_block.1} parent=1 // pred_fallthru
      _
    // Predicated region
    $region34: #{mamba_block.1} parent=1 // pred_check
      _
    $region35: #{mamba_block.1} parent=1 // pred_check_branch
      %78 = sbr.rel (0) target = $region37
    $region36: #{mamba_block.1} parent=1 // pred_region
      %s80 = ssub.s32 16, 16
      %81 = vsyncadd [#allocation12], %s80
      %s83 = sshll.u32 [#allocation11], 4
      %s84 = int_to_ptr.vmem [resolvable:$true] %s83
      %86 = dma.hbm_to_vmem [thread:$0]  %s8, 16, %s84, [#allocation12]
    $region37: #{mamba_block.1} parent=1 // pred_fallthru
      _
    // Predicated region
    $region38: #{mamba_block.1} parent=1 // pred_check
      _
    $region39: #{mamba_block.1} parent=1 // pred_check_branch
      %88 = sbr.rel (0) target = $region41
    $region40: #{mamba_block.1} parent=1 // pred_region
      %89 = dma.done [#allocation3], 128
    $region41: #{mamba_block.1} parent=1 // pred_fallthru
      _
    // Predicated region
    $region42: #{mamba_block.1} parent=1 // pred_check
      _
    $region43: #{mamba_block.1} parent=1 // pred_check_branch
      %91 = sbr.rel (0) target = $region45
    $region44: #{mamba_block.1} parent=1 // pred_region
      %92 = dma.done [#allocation6], 16
    $region45: #{mamba_block.1} parent=1 // pred_fallthru
      _
    // Predicated region
    $region46: #{mamba_block.1} parent=1 // pred_check
      _
    $region47: #{mamba_block.1} parent=1 // pred_check_branch
      %94 = sbr.rel (0) target = $region49
    $region48: #{mamba_block.1} parent=1 // pred_region
      %95 = dma.done [#allocation6], 16
    $region49: #{mamba_block.1} parent=1 // pred_fallthru
      _
    // Predicated region
    $region50: #{mamba_block.1} parent=1 // pred_check
      _
    $region51: #{mamba_block.1} parent=1 // pred_check_branch
      %97 = sbr.rel (0) target = $region53
    $region52: #{mamba_block.1} parent=1 // pred_region
      %98 = dma.done [#allocation9], 16
    $region53: #{mamba_block.1} parent=1 // pred_fallthru
      _
    // Predicated region
    $region54: #{mamba_block.1} parent=1 // pred_check
      _
    $region55: #{mamba_block.1} parent=1 // pred_check_branch
      %100 = sbr.rel (0) target = $region57
    $region56: #{mamba_block.1} parent=1 // pred_region
      %101 = dma.done [#allocation9], 16
    $region57: #{mamba_block.1} parent=1 // pred_fallthru
      _
    // Predicated region
    $region58: #{mamba_block.1} parent=1 // pred_check
      _
    $region59: #{mamba_block.1} parent=1 // pred_check_branch
      %103 = sbr.rel (0) target = $region61
    $region60: #{mamba_block.1} parent=1 // pred_region
      %104 = dma.done [#allocation12], 16
    $region61: #{mamba_block.1} parent=1 // pred_fallthru
      _
    %v106 = vld [vmem:[%s0] sm:$0xff]
    %v107 = vld [vmem:[%s0 + $0x8] sm:$0xff]
    %v108 = vpack.c.bf16 %v107, %v106
    %v109 = vld [vmem:[#allocation2] sm:$0xf]
    %v110 = vld [vmem:[#allocation2 + $0x4] sm:$0xf]
    %v111 = vld [vmem:[#allocation5] sm:$0x1]
    %v113 = vlaneseq
    %v114 = vshrl.u32 %v113, 7
    %v115 = vsub.s32 0, %v114
    %v116 = vrot.slane %v111, %v115
    %v120 = vunpack.c.l.b16 %v109
    %v121 = vunpack.c.l.b16 %v110
    %v122 = vpack.c.b16 %v121, %v120
    %vm124 = vcmask 130048
    %v126 = vsel %vm124, %v108, 0
    %128 = vmatprep.subr.bf16.mxu0 0
    %129 = vmatpush1.bf16.msra.mxu0 0
    %130 = vmatprep.subr.bf16.mxu0 0
    %131 = vmatpush1.bf16.msra.mxu0 0
    %132 = vmatprep.subr.bf16.mxu0 0
    %133 = vmatpush1.bf16.msra.mxu0 0
    %134 = vmatprep.subr.bf16.mxu0 0
    %135 = vmatpush1.bf16.msra.mxu0 0
    %136 = vmatprep.subr.bf16.mxu0 0
    %137 = vmatpush1.bf16.msra.mxu0 0
    %138 = vmatprep.subr.bf16.mxu0 0
    %139 = vmatpush1.bf16.msra.mxu0 0
    %140 = vmatprep.subr.bf16.mxu0 0
    %141 = vmatpush1.bf16.msra.mxu0 0
    %142 = vmatprep.subr.bf16.mxu0 0
    %143 = vmatpush1.bf16.msra.mxu0 %v122
    %144 = vmatprep.subr.bf16.mxu0 0
    %145 = vmatpush2.bf16.msra.mxu0 0
    %146 = vmatprep.subr.bf16.mxu0 0
    %147 = vmatpush2.bf16.msra.mxu0 0
    %148 = vmatprep.subr.bf16.mxu0 0
    %149 = vmatpush2.bf16.msra.mxu0 0
    %150 = vmatprep.subr.bf16.mxu0 0
    %151 = vmatpush2.bf16.msra.mxu0 0
    %152 = vmatprep.subr.bf16.mxu0 0
    %153 = vmatpush2.bf16.msra.mxu0 0
    %154 = vmatprep.subr.bf16.mxu0 0
    %155 = vmatpush2.bf16.msra.mxu0 0
    %156 = vmatprep.subr.bf16.mxu0 0
    %157 = vmatpush2.bf16.msra.mxu0 0
    %158 = vmatprep.subr.bf16.mxu0 0
    %159 = vmatpush2.bf16.msra.mxu0 0
    %160 = vmatprep.mubr.bf16.mxu0 0
    %161 = vmatmul.mubr.bf16.gmra.mxu0 %v126
    %v162 = vpop.f32.mrf.mxu0
    %v163 = vadd.f32 %v116, %v162
    %v164 = vpop.f32.mrf.mxu0
    %v165 = vpop.f32.mrf.mxu0
    %v166 = vadd.f32 %v116, %v165
    %v167 = vpop.f32.mrf.mxu0
    %168 = vdwg.mxu0
    %v169 = vpack.c.bf16 %v166, %v163
    %v170 = vld [vmem:[%s3] sm:$0xf]
    %v171 = vld [vmem:[%s3 + $0x4] sm:$0xf]
    %v172 = vld [vmem:[%s3 + $0x8] sm:$0xf]
    %v173 = vld [vmem:[%s3 + $0xc] sm:$0xf]
    %v174 = vld [vmem:[%s3 + $0x10] sm:$0xf]
    %v175 = vld [vmem:[%s3 + $0x14] sm:$0xf]
    %v176 = vld [vmem:[%s3 + $0x18] sm:$0xf]
    %v177 = vld [vmem:[%s3 + $0x1c] sm:$0xf]
    %v178 = vld [vmem:[%s3 + $0x20] sm:$0xf]
    %v179 = vld [vmem:[%s3 + $0x24] sm:$0xf]
    %v180 = vld [vmem:[%s3 + $0x28] sm:$0xf]
    %v181 = vld [vmem:[%s3 + $0x2c] sm:$0xf]
    %v182 = vld [vmem:[%s3 + $0x30] sm:$0xf]
    %v183 = vld [vmem:[%s3 + $0x34] sm:$0xf]
    %v184 = vld [vmem:[%s3 + $0x38] sm:$0xf]
    %v185 = vld [vmem:[%s3 + $0x3c] sm:$0xf]
    %v186 = vld [vmem:[#allocation7] sm:$0x1]
    %v188 = vlaneseq
    %v189 = vshrl.u32 %v188, 7
    %v190 = vsub.s32 0, %v189
    %v191 = vrot.slane %v186, %v190
    %v209 = vunpack.c.l.b16 %v170
    %v210 = vunpack.c.l.b16 %v171
    %v211 = vunpack.c.l.b16 %v172
    %v212 = vunpack.c.l.b16 %v173
    %v213 = vunpack.c.l.b16 %v174
    %v214 = vunpack.c.l.b16 %v175
    %v215 = vunpack.c.l.b16 %v176
    %v216 = vunpack.c.l.b16 %v177
    %v217 = vunpack.c.l.b16 %v178
    %v218 = vunpack.c.l.b16 %v179
    %v219 = vunpack.c.l.b16 %v180
    %v220 = vunpack.c.l.b16 %v181
    %v221 = vunpack.c.l.b16 %v182
    %v222 = vunpack.c.l.b16 %v183
    %v223 = vunpack.c.l.b16 %v184
    %v224 = vunpack.c.l.b16 %v185
    %v225 = vpack.c.b16 %v210, %v209
    %v226 = vpack.c.b16 %v212, %v211
    %v227 = vpack.c.b16 %v214, %v213
    %v228 = vpack.c.b16 %v216, %v215
    %v229 = vpack.c.b16 %v218, %v217
    %v230 = vpack.c.b16 %v220, %v219
    %v231 = vpack.c.b16 %v222, %v221
    %v232 = vpack.c.b16 %v224, %v223
    %241 = vmatprep.subr.bf16.mxu0 0
    %242 = vmatpush1.bf16.msra.mxu0 %v232
    %243 = vmatprep.subr.bf16.mxu0 0
    %244 = vmatpush1.bf16.msra.mxu0 %v231
    %245 = vmatprep.subr.bf16.mxu0 0
    %246 = vmatpush1.bf16.msra.mxu0 %v230
    %247 = vmatprep.subr.bf16.mxu0 0
    %248 = vmatpush1.bf16.msra.mxu0 %v229
    %249 = vmatprep.subr.bf16.mxu0 0
    %250 = vmatpush1.bf16.msra.mxu0 %v228
    %251 = vmatprep.subr.bf16.mxu0 0
    %252 = vmatpush1.bf16.msra.mxu0 %v227
    %253 = vmatprep.subr.bf16.mxu0 0
    %254 = vmatpush1.bf16.msra.mxu0 %v226
    %255 = vmatprep.subr.bf16.mxu0 0
    %256 = vmatpush1.bf16.msra.mxu0 %v225
    %257 = vmatprep.subr.bf16.mxu0 0
    %258 = vmatpush2.bf16.msra.mxu0 0
    %259 = vmatprep.subr.bf16.mxu0 0
    %260 = vmatpush2.bf16.msra.mxu0 0
    %261 = vmatprep.subr.bf16.mxu0 0
    %262 = vmatpush2.bf16.msra.mxu0 0
    %263 = vmatprep.subr.bf16.mxu0 0
    %264 = vmatpush2.bf16.msra.mxu0 0
    %265 = vmatprep.subr.bf16.mxu0 0
    %266 = vmatpush2.bf16.msra.mxu0 0
    %267 = vmatprep.subr.bf16.mxu0 0
    %268 = vmatpush2.bf16.msra.mxu0 0
    %269 = vmatprep.subr.bf16.mxu0 0
    %270 = vmatpush2.bf16.msra.mxu0 0
    %271 = vmatprep.subr.bf16.mxu0 0
    %272 = vmatpush2.bf16.msra.mxu0 0
    %273 = vmatprep.mubr.bf16.mxu0 0
    %274 = vmatmul.mubr.bf16.gmra.mxu0 %v169
    %v275 = vpop.f32.mrf.mxu0
    %v276 = vadd.f32 %v191, %v275
    %v277 = vpop.f32.mrf.mxu0
    %v278 = vpop.f32.mrf.mxu0
    %v279 = vadd.f32 %v191, %v278
    %v280 = vpop.f32.mrf.mxu0
    %281 = vdwg.mxu0
    %v282 = vadd.f32 %v163, %v276
    %v283 = vadd.f32 %v166, %v279
    %v284 = vmax.f32 %v282, 0.0
    %v285 = vmax.f32 %v283, 0.0
    %v286 = vpack.c.bf16 %v285, %v284
    %v287 = vld [vmem:[%s5] sm:$0xf]
    %v288 = vld [vmem:[%s5 + $0x4] sm:$0xf]
    %v289 = vld [vmem:[%s5 + $0x8] sm:$0xf]
    %v290 = vld [vmem:[%s5 + $0xc] sm:$0xf]
    %v291 = vld [vmem:[%s5 + $0x10] sm:$0xf]
    %v292 = vld [vmem:[%s5 + $0x14] sm:$0xf]
    %v293 = vld [vmem:[%s5 + $0x18] sm:$0xf]
    %v294 = vld [vmem:[%s5 + $0x1c] sm:$0xf]
    %v295 = vld [vmem:[%s5 + $0x20] sm:$0xf]
    %v296 = vld [vmem:[%s5 + $0x24] sm:$0xf]
    %v297 = vld [vmem:[%s5 + $0x28] sm:$0xf]
    %v298 = vld [vmem:[%s5 + $0x2c] sm:$0xf]
    %v299 = vld [vmem:[%s5 + $0x30] sm:$0xf]
    %v300 = vld [vmem:[%s5 + $0x34] sm:$0xf]
    %v301 = vld [vmem:[%s5 + $0x38] sm:$0xf]
    %v302 = vld [vmem:[%s5 + $0x3c] sm:$0xf]
    %v303 = vld [vmem:[#allocation8] sm:$0x1]
    %v305 = vlaneseq
    %v306 = vshrl.u32 %v305, 7
    %v307 = vsub.s32 0, %v306
    %v308 = vrot.slane %v303, %v307
    %v326 = vunpack.c.l.b16 %v287
    %v327 = vunpack.c.l.b16 %v288
    %v328 = vunpack.c.l.b16 %v289
    %v329 = vunpack.c.l.b16 %v290
    %v330 = vunpack.c.l.b16 %v291
    %v331 = vunpack.c.l.b16 %v292
    %v332 = vunpack.c.l.b16 %v293
    %v333 = vunpack.c.l.b16 %v294
    %v334 = vunpack.c.l.b16 %v295
    %v335 = vunpack.c.l.b16 %v296
    %v336 = vunpack.c.l.b16 %v297
    %v337 = vunpack.c.l.b16 %v298
    %v338 = vunpack.c.l.b16 %v299
    %v339 = vunpack.c.l.b16 %v300
    %v340 = vunpack.c.l.b16 %v301
    %v341 = vunpack.c.l.b16 %v302
    %v342 = vpack.c.b16 %v327, %v326
    %v343 = vpack.c.b16 %v329, %v328
    %v344 = vpack.c.b16 %v331, %v330
    %v345 = vpack.c.b16 %v333, %v332
    %v346 = vpack.c.b16 %v335, %v334
    %v347 = vpack.c.b16 %v337, %v336
    %v348 = vpack.c.b16 %v339, %v338
    %v349 = vpack.c.b16 %v341, %v340
    %358 = vmatprep.subr.bf16.mxu0 0
    %359 = vmatpush1.bf16.msra.mxu0 %v349
    %360 = vmatprep.subr.bf16.mxu0 0
    %361 = vmatpush1.bf16.msra.mxu0 %v348
    %362 = vmatprep.subr.bf16.mxu0 0
    %363 = vmatpush1.bf16.msra.mxu0 %v347
    %364 = vmatprep.subr.bf16.mxu0 0
    %365 = vmatpush1.bf16.msra.mxu0 %v346
    %366 = vmatprep.subr.bf16.mxu0 0
    %367 = vmatpush1.bf16.msra.mxu0 %v345
    %368 = vmatprep.subr.bf16.mxu0 0
    %369 = vmatpush1.bf16.msra.mxu0 %v344
    %370 = vmatprep.subr.bf16.mxu0 0
    %371 = vmatpush1.bf16.msra.mxu0 %v343
    %372 = vmatprep.subr.bf16.mxu0 0
    %373 = vmatpush1.bf16.msra.mxu0 %v342
    %374 = vmatprep.subr.bf16.mxu0 0
    %375 = vmatpush2.bf16.msra.mxu0 0
    %376 = vmatprep.subr.bf16.mxu0 0
    %377 = vmatpush2.bf16.msra.mxu0 0
    %378 = vmatprep.subr.bf16.mxu0 0
    %379 = vmatpush2.bf16.msra.mxu0 0
    %380 = vmatprep.subr.bf16.mxu0 0
    %381 = vmatpush2.bf16.msra.mxu0 0
    %382 = vmatprep.subr.bf16.mxu0 0
    %383 = vmatpush2.bf16.msra.mxu0 0
    %384 = vmatprep.subr.bf16.mxu0 0
    %385 = vmatpush2.bf16.msra.mxu0 0
    %386 = vmatprep.subr.bf16.mxu0 0
    %387 = vmatpush2.bf16.msra.mxu0 0
    %388 = vmatprep.subr.bf16.mxu0 0
    %389 = vmatpush2.bf16.msra.mxu0 0
    %390 = vmatprep.mubr.bf16.mxu0 0
    %391 = vmatmul.mubr.bf16.gmra.mxu0 %v286
    %v392 = vpop.f32.mrf.mxu0
    %v393 = vadd.f32 %v308, %v392
    %v394 = vpop.f32.mrf.mxu0
    %v395 = vpop.f32.mrf.mxu0
    %v396 = vadd.f32 %v308, %v395
    %v397 = vpop.f32.mrf.mxu0
    %398 = vdwg.mxu0
    %v399 = vadd.f32 %v393, %v106
    %v400 = vadd.f32 %v396, %v107
    %v401 = vsel %vm124, %v399, 0.0
    %402 = vadd.xlane.f32.xlu0 %v401
    %v403 = vpop.xlane.xlu0 %402
    %v404 = vsel %vm124, %v400, 0.0
    %405 = vadd.xlane.f32.xlu0 %v404
    %v406 = vpop.xlane.xlu0 %405
    %v407 = vrcp.pop 16.0
    %v408 = vmul.f32 %v403, %v407
    %v409 = vmul.f32 %v406, %v407
    %v410 = vsub.f32 %v399, %v408
    %v411 = vsub.f32 %v400, %v409
    %v412 = vmul.f32 %v410, %v410
    %v413 = vmul.f32 %v411, %v411
    %v414 = vsel %vm124, %v412, 0.0
    %415 = vadd.xlane.f32.xlu0 %v414
    %v416 = vpop.xlane.xlu0 %415
    %v417 = vsel %vm124, %v413, 0.0
    %418 = vadd.xlane.f32.xlu0 %v417
    %v419 = vpop.xlane.xlu0 %418
    %v420 = vmul.f32 %v416, %v407
    %v421 = vmul.f32 %v419, %v407
    %v422 = vadd.f32 %v420, 1e-05
    %v423 = vadd.f32 %v421, 1e-05
    %v424 = vrsqrt.pop %v422
    %v425 = vrsqrt.pop %v423
    %v426 = vmul.f32 %v410, %v424
    %v427 = vmul.f32 %v411, %v425
    %v428 = vld [vmem:[#allocation10] sm:$0x1]
    %v430 = vlaneseq
    %v431 = vshrl.u32 %v430, 7
    %v432 = vsub.s32 0, %v431
    %v433 = vrot.slane %v428, %v432
    %v435 = vmul.f32 %v426, %v433
    %v436 = vmul.f32 %v427, %v433
    %v437 = vld [vmem:[#allocation11] sm:$0x1]
    %v439 = vlaneseq
    %v440 = vshrl.u32 %v439, 7
    %v441 = vsub.s32 0, %v440
    %v442 = vrot.slane %v437, %v441
    %v444 = vadd.f32 %v435, %v442
    %v445 = vadd.f32 %v436, %v442
    %446 = vst.msk [vmem:[#allocation13] sm:$0xff] %vm124, %v444
    %447 = vst.msk [vmem:[#allocation13 + $0x8] sm:$0xff] %vm124, %v445
    // Predicated region
    $region62: #{mamba_block.1} parent=1 // pred_check
      _
    $region63: #{mamba_block.1} parent=1 // pred_check_branch
      %449 = sbr.rel (0) target = $region65
    $region64: #{mamba_block.1} parent=1 // pred_region
      %s451 = ssub.s32 256, 256
      %452 = vsyncadd [#allocation4], %s451
      %s453 = sshll.u32 [#allocation13], 4
      %s454 = int_to_ptr.vmem [resolvable:$true] %s453
      %459 = dma.vmem_to_hbm [thread:$0]  %s454, 256, %s9, [#allocation4], 128, 128, 8
    $region65: #{mamba_block.1} parent=1 // pred_fallthru
      _
    // Predicated region
    $region66: #{mamba_block.1} parent=1 // pred_check
      _
    $region67: #{mamba_block.1} parent=1 // pred_check_branch
      %461 = sbr.rel (0) target = $region69
    $region68: #{mamba_block.1} parent=1 // pred_region
      %462 = dma.done [#allocation4], 256
    $region69: #{mamba_block.1} parent=1 // pred_fallthru
      _
    %463 = vsyncpa [#allocation3], 1
    %464 = vsyncpa [#allocation6], 1
    %465 = vsyncpa [#allocation9], 1
    %466 = vsyncpa [#allocation12], 1
    %467 = vsyncpa [#allocation4], 1

</llo_original>
